<compile_context>
chip_gen: v7x
topology: tpu7x:2x2x1
jax: 0.10.0
libtpu: 0.0.40
codegen_flags: <defaults>
</compile_context>

<pallas_src>
import functools

import jax
import jax.numpy as jnp
from jax.experimental import pallas as pl
from jax.experimental.pallas import tpu as pltpu

_LANE = 128


# ---------------------------------------------------------------------------
# Generation-aware VMEM budgets.
# ---------------------------------------------------------------------------
@functools.lru_cache(maxsize=None)
def _vmem_limit_bytes():
    """Scoped-VMEM limit: ~half of physical VMEM, capped at 64 MiB.

    128 MiB parts (v5e/v6e) -> 64 MiB; 64 MiB parts (v7x) -> 32 MiB.
    """
    cap = 64 * 1024 * 1024  # conservative (v7x-sized) fallback
    try:
        cap = int(pltpu.get_tpu_info().vmem_capacity_bytes)
    except Exception:  # non-TPU backend or API drift — stay conservative
        pass
    return int(min(cap // 2, 64 * 1024 * 1024))


def _h_resident_budget_bytes():
    # Budget for keeping the activation operand fully resident in the tiled
    # aggregation kernel (on top of adjacency double-buffers + accumulator).
    return min(8 * 1024 * 1024, _vmem_limit_bytes() // 4)


def _fused_resident_bytes(n_pad, dims_p):
    """Conservative estimate of everything the fused kernel keeps in VMEM."""
    adj = n_pad * n_pad * 2                              # bf16 adjacency
    h0 = n_pad * dims_p[0] * 4                           # f32 input features
    act = n_pad * max(dims_p) * (4 + 2)                  # widest f32 value + bf16 cast
    wts = sum(dims_p[i] * dims_p[i + 1] * 2 + dims_p[i + 1] * 4
              for i in range(len(dims_p) - 1))
    out = n_pad * dims_p[-1] * 4
    # Inputs/outputs may be double-buffered by the pipeline even at grid=(1,).
    return 2 * (adj + h0 + wts + out) + act


def _pick_tile(n_pad):
    for t in (512, 256, 128):
        if n_pad % t == 0:
            return t
    return n_pad  # unreachable: n_pad is always a multiple of 128


# ---------------------------------------------------------------------------
# Shared per-layer math (used inside the fused kernel AND in the pure-JAX
# reference so both follow the same matmul order and bf16 input casts).
# ---------------------------------------------------------------------------
def _layer_math(adj_b, h_f32, w_b, b_f32, *, transform_first, apply_relu):
    if transform_first:
        # feature transform first (output width <= input width)
        hw = jnp.dot(h_f32.astype(jnp.bfloat16), w_b,
                     preferred_element_type=jnp.float32)
        out = jnp.dot(adj_b, hw.astype(jnp.bfloat16),
                      preferred_element_type=jnp.float32)
    else:
        # aggregate first at the narrower (input) width
        ah = jnp.dot(adj_b, h_f32.astype(jnp.bfloat16),
                     preferred_element_type=jnp.float32)
        out = jnp.dot(ah.astype(jnp.bfloat16), w_b,
                      preferred_element_type=jnp.float32)
    out = out + b_f32
    if apply_relu:
        out = jnp.maximum(out, 0.0)
    return out


# ---------------------------------------------------------------------------
# Fused kernel: all GraphConv layers in one pallas_call (small graphs).
# refs = (adj, h0, w_0..w_{L-1}, b_0..b_{L-1}, out)
# ---------------------------------------------------------------------------
def _fused_gcn_kernel(*refs, num_layers, transform_first, relu_flags):
    adj_ref, h_ref = refs[0], refs[1]
    w_refs = refs[2:2 + num_layers]
    b_refs = refs[2 + num_layers:2 + 2 * num_layers]
    out_ref = refs[2 + 2 * num_layers]

    adj = adj_ref[...]                      # (Np, Np) bf16, loaded once
    h = h_ref[...].astype(jnp.float32)      # (Np, F0p) f32
    for l in range(num_layers):
        h = _layer_math(adj, h, w_refs[l][...], b_refs[l][...],
                        transform_first=transform_first[l],
                        apply_relu=relu_flags[l])
    out_ref[...] = h.astype(out_ref.dtype)


def _gcn_fused(adj_b, h0, w_pads, b_pads, plan, relu_flags):
    num_layers = len(w_pads)
    n_pad = adj_b.shape[0]
    f_last_p = w_pads[-1].shape[1]
    kernel = functools.partial(_fused_gcn_kernel, num_layers=num_layers,
                               transform_first=plan, relu_flags=relu_flags)
    operands = [adj_b, h0] + list(w_pads) + list(b_pads)
    in_specs = [pl.BlockSpec(op.shape, lambda i: (0, 0)) for op in operands]
    return pl.pallas_call(
        kernel,
        out_shape=jax.ShapeDtypeStruct((n_pad, f_last_p), jnp.float32),
        grid=(1,),
        in_specs=in_specs,
        out_specs=pl.BlockSpec((n_pad, f_last_p), lambda i: (0, 0)),
        compiler_params=pltpu.CompilerParams(
            dimension_semantics=("arbitrary",),
            vmem_limit_bytes=_vmem_limit_bytes(),
        ),
    )(*operands)


# ---------------------------------------------------------------------------
# Tiled path, kernel 1: row-tiled feature transform HW = H @ W (hoisted out of
# the aggregation grid so it is computed exactly once per layer).
# ---------------------------------------------------------------------------
def _transform_kernel(h_ref, w_ref, o_ref):
    o_ref[...] = jnp.dot(h_ref[...], w_ref[...],
                         preferred_element_type=jnp.float32).astype(o_ref.dtype)


def _transform(h_b, w_b):
    n_pad, fin_p = h_b.shape
    fout_p = w_b.shape[1]
    tm = _pick_tile(n_pad)
    return pl.pallas_call(
        _transform_kernel,
        out_shape=jax.ShapeDtypeStruct((n_pad, fout_p), jnp.bfloat16),
        grid=(n_pad // tm,),
        in_specs=[pl.BlockSpec((tm, fin_p), lambda i: (i, 0)),
                  pl.BlockSpec((fin_p, fout_p), lambda i: (0, 0))],
        out_specs=pl.BlockSpec((tm, fout_p), lambda i: (i, 0)),
        compiler_params=pltpu.CompilerParams(
            dimension_semantics=("parallel",),
            vmem_limit_bytes=_vmem_limit_bytes(),
        ),
    )(h_b, w_b)


# ---------------------------------------------------------------------------
# Tiled path, kernel 2: aggregation OUT = A @ X (+ optional @ W) + b (+ReLU).
# The (Np, Np) adjacency streams in (TM, TK) tiles over grid (row block i,
# K block k); X (= H or HW) is kept fully resident in VMEM when it fits and
# sliced per k-block in-kernel; the f32 VMEM accumulator is finalized (W for
# aggregate-first order, bias, ReLU, dtype cast) only at k == last.
# ---------------------------------------------------------------------------
def _aggregate_kernel(*refs, apply_w, apply_relu, h_resident, tk):
    if apply_w:
        adj_ref, x_ref, w_ref, b_ref, out_ref, acc_ref = refs
    else:
        adj_ref, x_ref, b_ref, out_ref, acc_ref = refs
        w_ref = None

    k = pl.program_id(1)
    nk = pl.num_programs(1)

    @pl.when(k == 0)
    def _init():
        acc_ref[...] = jnp.zeros_like(acc_ref)

    if h_resident:
        start = pl.multiple_of(k * tk, tk)
        x = x_ref[pl.ds(start, tk), :]
    else:
        x = x_ref[...]
    acc_ref[...] += jnp.dot(adj_ref[...], x, preferred_element_type=jnp.float32)

    @pl.when(k == nk - 1)
    def _finalize():
        out = acc_ref[...]
        if apply_w:
            out = jnp.dot(out.astype(jnp.bfloat16), w_ref[...],
                          preferred_element_type=jnp.float32)
        out = out + b_ref[...]
        if apply_relu:
            out = jnp.maximum(out, 0.0)
        out_ref[...] = out.astype(out_ref.dtype)


def _aggregate_tiled(adj_b, x_b, w_b, b_f, *, apply_w, apply_relu, out_dtype):
    n_pad = adj_b.shape[0]
    x_width = x_b.shape[1]
    fout_p = w_b.shape[1] if apply_w else x_width
    tm = _pick_tile(n_pad)
    tk = tm
    h_resident = (n_pad * x_width * x_b.dtype.itemsize
                  <= _h_resident_budget_bytes())

    in_specs = [pl.BlockSpec((tm, tk), lambda i, k: (i, k))]
    operands = [adj_b]
    if h_resident:
        # Constant block index -> DMA'd once, resident across the whole grid.
        in_specs.append(pl.BlockSpec((n_pad, x_width), lambda i, k: (0, 0)))
    else:
        in_specs.append(pl.BlockSpec((tk, x_width), lambda i, k: (k, 0)))
    operands.append(x_b)
    if apply_w:
        in_specs.append(pl.BlockSpec((x_width, fout_p), lambda i, k: (0, 0)))
        operands.append(w_b)
    in_specs.append(pl.BlockSpec((1, fout_p), lambda i, k: (0, 0)))
    operands.append(b_f)

    kernel = functools.partial(_aggregate_kernel, apply_w=apply_w,
                               apply_relu=apply_relu, h_resident=h_resident,
                               tk=tk)
    return pl.pallas_call(
        kernel,
        out_shape=jax.ShapeDtypeStruct((n_pad, fout_p), out_dtype),
        grid=(n_pad // tm, n_pad // tk),
        in_specs=in_specs,
        out_specs=pl.BlockSpec((tm, fout_p), lambda i, k: (i, 0)),
        scratch_shapes=[pltpu.VMEM((tm, x_width), jnp.float32)],
        compiler_params=pltpu.CompilerParams(
            dimension_semantics=("parallel", "arbitrary"),
            vmem_limit_bytes=_vmem_limit_bytes(),
        ),
    )(*operands)


# ---------------------------------------------------------------------------
# Wrapper-side layout plumbing: pad to lane-dense sizes, cast matmul inputs
# to bf16, pick the per-layer matmul order.
# ---------------------------------------------------------------------------
def _round_up(x, m):
    return ((x + m - 1) // m) * m


def _pad2d(x, rows, cols):
    r, c = x.shape
    return jnp.pad(x, ((0, rows - r), (0, cols - c)))


def _prepare(adj, feat, params):
    n = adj.shape[0]
    n_pad = _round_up(n, _LANE)
    dims = [feat.shape[1]] + [w.shape[1] for w, _ in params]
    dims_p = [_round_up(d, _LANE) for d in dims]

    adj_b = _pad2d(adj.astype(jnp.float32), n_pad, n_pad).astype(jnp.bfloat16)
    h0 = _pad2d(feat.astype(jnp.float32), n_pad, dims_p[0])

    w_pads, b_pads, plan, relu_flags = [], [], [], []
    num_layers = len(params)
    for l, (w, b) in enumerate(params):
        fin_p, fout_p = dims_p[l], dims_p[l + 1]
        w_pads.append(_pad2d(w.astype(jnp.float32), fin_p, fout_p)
                      .astype(jnp.bfloat16))
        b_pads.append(_pad2d(b.astype(jnp.float32), 1, fout_p))
        plan.append(fout_p <= fin_p)          # transform-first if output narrower
        relu_flags.append(l < num_layers - 1)  # ReLU on all but the final layer
    return (adj_b, h0, w_pads, b_pads, tuple(plan), tuple(relu_flags),
            n, dims[-1], dims_p)


def gcn_forward(adj, feat, params, *, force_tiled=False):
    """Mirrors GCN.forward: hidden GraphConv layers + ReLU, then final layer."""
    (adj_b, h0, w_pads, b_pads, plan, relu_flags, n, f_out,
     dims_p) = _prepare(adj, feat, params)
    n_pad = adj_b.shape[0]
    fused_budget = int(0.75 * _vmem_limit_bytes())
    use_fused = ((not force_tiled)
                 and _fused_resident_bytes(n_pad, dims_p) <= fused_budget)

    if use_fused:
        out_p = _gcn_fused(adj_b, h0, w_pads, b_pads, plan, relu_flags)
    else:
        h = h0.astype(jnp.bfloat16)
        num_layers = len(w_pads)
        out_p = None
        for l in range(num_layers):
            last = (l == num_layers - 1)
            out_dtype = jnp.float32 if last else jnp.bfloat16
            if plan[l]:
                # Transform-first: hoist HW = H @ W out of the aggregation
                # grid (computed once), then aggregation-only stream at the
                # narrower output width.
                hw = _transform(h, w_pads[l])
                out_p = _aggregate_tiled(adj_b, hw, w_pads[l], b_pads[l],
                                         apply_w=False,
                                         apply_relu=relu_flags[l],
                                         out_dtype=out_dtype)
            else:
                # Aggregate-first at the narrower input width; W applied in
                # the k == last epilogue.
                out_p = _aggregate_tiled(adj_b, h, w_pads[l], b_pads[l],
                                         apply_w=True,
                                         apply_relu=relu_flags[l],
                                         out_dtype=out_dtype)
            h = out_p  # bf16 for intermediate layers: no wrapper-side cast
    return out_p[:n, :f_out]


def gcn_reference(adj, feat, params):
    """Pure-JAX mirror of the kernel math (same padding, order, bf16 casts)."""
    (adj_b, h, w_pads, b_pads, plan, relu_flags, n, f_out, _) = _prepare(
        adj, feat, params)
    for l in range(len(w_pads)):
        h = _layer_math(adj_b, h, w_pads[l], b_pads[l],
                        transform_first=plan[l], apply_relu=relu_flags[l])
    return h[:n, :f_out]


# ---------------------------------------------------------------------------
# Module-equivalent parameter init and graph construction.
# ---------------------------------------------------------------------------
def init_gcn_params(key, in_feats, h_feats, num_classes):
    """Glorot-uniform weights, zero biases (matches DGL GraphConv init)."""
    if not isinstance(h_feats, (list, tuple)):
        h_feats = [h_feats]
    dims = [in_feats] + list(h_feats) + [num_classes]
    params = []
    for i in range(1, len(dims)):
        key, sub = jax.random.split(key)
        fan_in, fan_out = dims[i - 1], dims[i]
        limit = jnp.sqrt(6.0 / (fan_in + fan_out))
        w = jax.random.uniform(sub, (fan_in, fan_out), jnp.float32,
                               -limit, limit)
        b = jnp.zeros((1, fan_out), jnp.float32)
        params.append((w, b))
    return params


def build_normalized_adjacency(key, n_nodes, p_edge=0.3):
    """Random undirected graph with self-loops, symmetric normalization."""
    a = (jax.random.uniform(key, (n_nodes, n_nodes)) < p_edge).astype(jnp.float32)
    a = jnp.maximum(a, a.T)                  # undirected
    a = jnp.maximum(a, jnp.eye(n_nodes))     # self-loops (no zero degree)
    deg = jnp.sum(a, axis=1)
    d_inv_sqrt = 1.0 / jnp.sqrt(deg)
    return d_inv_sqrt[:, None] * a * d_inv_sqrt[None, :]


if __name__ == "__main__":
    key = jax.random.PRNGKey(0)
    k_g1, k_f1, k_p1, k_g2, k_f2, k_p2 = jax.random.split(key, 6)

    # --- Test 1: small graph, fused single-kernel path -----------------------
    n_nodes, in_feats, h_feats, num_classes = 16, 8, [32, 16], 4
    adj = build_normalized_adjacency(k_g1, n_nodes)
    feat = jax.random.normal(k_f1, (n_nodes, in_feats), jnp.float32)
    params = init_gcn_params(k_p1, in_feats, h_feats, num_classes)

    logits = gcn_forward(adj, feat, params)
    jax.block_until_ready(logits)
    ref = gcn_reference(adj, feat, params)
    assert logits.shape == (n_nodes, num_classes)
    assert jnp.allclose(logits, ref, atol=1e-2, rtol=1e-2)

    # --- Test 2: larger graph exercising the tiled aggregation path ----------
    # layer 0: 8 -> 256 (aggregate-first), layer 1: 256 -> 4 (transform-first
    # with hoisted H @ W), so both tiled branches run.
    n2, in2, h2, c2 = 512, 8, [256], 4
    adj2 = build_normalized_adjacency(k_g2, n2, p_edge=0.02)
    feat2 = jax.random.normal(k_f2, (n2, in2), jnp.float32)
    params2 = init_gcn_params(k_p2, in2, h2, c2)

    logits2 = gcn_forward(adj2, feat2, params2, force_tiled=True)
    jax.block_until_ready(logits2)
    ref2 = gcn_reference(adj2, feat2, params2)
    assert logits2.shape == (n2, c2)
    assert jnp.allclose(logits2, ref2, atol=1e-2, rtol=1e-2)

    print("KERNEL_OK")
</pallas_src>

<mosaic_0001>
module attributes {stable_mosaic.version = 11 : i64} {
  func.func @_fused_gcn_kernel(%arg0: i32, %arg1: memref<128x128xbf16, #tpu.memory_space<vmem>>, %arg2: memref<128x128xf32, #tpu.memory_space<vmem>>, %arg3: memref<128x128xbf16, #tpu.memory_space<vmem>>, %arg4: memref<128x128xbf16, #tpu.memory_space<vmem>>, %arg5: memref<128x128xbf16, #tpu.memory_space<vmem>>, %arg6: memref<1x128xf32, #tpu.memory_space<vmem>>, %arg7: memref<1x128xf32, #tpu.memory_space<vmem>>, %arg8: memref<1x128xf32, #tpu.memory_space<vmem>>, %arg9: memref<128x128xf32, #tpu.memory_space<vmem>>) attributes {dimension_semantics = [#tpu.dimension_semantics<arbitrary>], iteration_bounds = array<i64: 1>, scalar_prefetch = 0 : i64, scratch_operands = 0 : i64, tpu.core_type = #tpu.core_type<tc>, window_params = [{pipeline_mode = #tpu.pipeline_mode<synchronous>, transform_indices = @transform_0, window_bounds = array<i64: 128, 128>}, {pipeline_mode = #tpu.pipeline_mode<synchronous>, transform_indices = @transform_1, window_bounds = array<i64: 128, 128>}, {pipeline_mode = #tpu.pipeline_mode<synchronous>, transform_indices = @transform_2, window_bounds = array<i64: 128, 128>}, {pipeline_mode = #tpu.pipeline_mode<synchronous>, transform_indices = @transform_3, window_bounds = array<i64: 128, 128>}, {pipeline_mode = #tpu.pipeline_mode<synchronous>, transform_indices = @transform_4, window_bounds = array<i64: 128, 128>}, {pipeline_mode = #tpu.pipeline_mode<synchronous>, transform_indices = @transform_5, window_bounds = array<i64: 1, 128>}, {pipeline_mode = #tpu.pipeline_mode<synchronous>, transform_indices = @transform_6, window_bounds = array<i64: 1, 128>}, {pipeline_mode = #tpu.pipeline_mode<synchronous>, transform_indices = @transform_7, window_bounds = array<i64: 1, 128>}, {pipeline_mode = #tpu.pipeline_mode<synchronous>, transform_indices = @transform_8, window_bounds = array<i64: 128, 128>}]} {
    %c0 = arith.constant 0 : index
    %c0_0 = arith.constant 0 : index
    %0 = vector.load %arg1[%c0, %c0_0] : memref<128x128xbf16, #tpu.memory_space<vmem>>, vector<128x128xbf16>
    %c0_1 = arith.constant 0 : index
    %c0_2 = arith.constant 0 : index
    %1 = vector.load %arg2[%c0_1, %c0_2] : memref<128x128xf32, #tpu.memory_space<vmem>>, vector<128x128xf32>
    %c0_3 = arith.constant 0 : index
    %c0_4 = arith.constant 0 : index
    %2 = vector.load %arg3[%c0_3, %c0_4] : memref<128x128xbf16, #tpu.memory_space<vmem>>, vector<128x128xbf16>
    %c0_5 = arith.constant 0 : index
    %c0_6 = arith.constant 0 : index
    %3 = vector.load %arg6[%c0_5, %c0_6] : memref<1x128xf32, #tpu.memory_space<vmem>>, vector<1x128xf32>
    %4 = arith.truncf %1 : vector<128x128xf32> to vector<128x128xbf16>
    %cst = arith.constant dense<0.000000e+00> : vector<128x128xf32>
    %5 = tpu.matmul %4, %2, %cst {dimension_numbers = #tpu.dot_dimension_numbers<[1], [0], [0], [1], [0, 0, 1, 1], [], []>} : vector<128x128xbf16>, vector<128x128xbf16>, vector<128x128xf32> -> vector<128x128xf32>
    %6 = arith.truncf %5 : vector<128x128xf32> to vector<128x128xbf16>
    %cst_7 = arith.constant dense<0.000000e+00> : vector<128x128xf32>
    %7 = tpu.matmul %0, %6, %cst_7 {dimension_numbers = #tpu.dot_dimension_numbers<[1], [0], [0], [1], [0, 0, 1, 1], [], []>} : vector<128x128xbf16>, vector<128x128xbf16>, vector<128x128xf32> -> vector<128x128xf32>
    %8 = vector.broadcast %3 : vector<1x128xf32> to vector<128x128xf32>
    %9 = arith.addf %7, %8 : vector<128x128xf32>
    %cst_8 = arith.constant 0.000000e+00 : f32
    %10 = vector.broadcast %cst_8 : f32 to vector<128x128xf32>
    %11 = arith.maximumf %9, %10 : vector<128x128xf32>
    %c0_9 = arith.constant 0 : index
    %c0_10 = arith.constant 0 : index
    %12 = vector.load %arg4[%c0_9, %c0_10] : memref<128x128xbf16, #tpu.memory_space<vmem>>, vector<128x128xbf16>
    %c0_11 = arith.constant 0 : index
    %c0_12 = arith.constant 0 : index
    %13 = vector.load %arg7[%c0_11, %c0_12] : memref<1x128xf32, #tpu.memory_space<vmem>>, vector<1x128xf32>
    %14 = arith.truncf %11 : vector<128x128xf32> to vector<128x128xbf16>
    %cst_13 = arith.constant dense<0.000000e+00> : vector<128x128xf32>
    %15 = tpu.matmul %14, %12, %cst_13 {dimension_numbers = #tpu.dot_dimension_numbers<[1], [0], [0], [1], [0, 0, 1, 1], [], []>} : vector<128x128xbf16>, vector<128x128xbf16>, vector<128x128xf32> -> vector<128x128xf32>
    %16 = arith.truncf %15 : vector<128x128xf32> to vector<128x128xbf16>
    %cst_14 = arith.constant dense<0.000000e+00> : vector<128x128xf32>
    %17 = tpu.matmul %0, %16, %cst_14 {dimension_numbers = #tpu.dot_dimension_numbers<[1], [0], [0], [1], [0, 0, 1, 1], [], []>} : vector<128x128xbf16>, vector<128x128xbf16>, vector<128x128xf32> -> vector<128x128xf32>
    %18 = vector.broadcast %13 : vector<1x128xf32> to vector<128x128xf32>
    %19 = arith.addf %17, %18 : vector<128x128xf32>
    %cst_15 = arith.constant 0.000000e+00 : f32
    %20 = vector.broadcast %cst_15 : f32 to vector<128x128xf32>
    %21 = arith.maximumf %19, %20 : vector<128x128xf32>
    %c0_16 = arith.constant 0 : index
    %c0_17 = arith.constant 0 : index
    %22 = vector.load %arg5[%c0_16, %c0_17] : memref<128x128xbf16, #tpu.memory_space<vmem>>, vector<128x128xbf16>
    %c0_18 = arith.constant 0 : index
    %c0_19 = arith.constant 0 : index
    %23 = vector.load %arg8[%c0_18, %c0_19] : memref<1x128xf32, #tpu.memory_space<vmem>>, vector<1x128xf32>
    %24 = arith.truncf %21 : vector<128x128xf32> to vector<128x128xbf16>
    %cst_20 = arith.constant dense<0.000000e+00> : vector<128x128xf32>
    %25 = tpu.matmul %24, %22, %cst_20 {dimension_numbers = #tpu.dot_dimension_numbers<[1], [0], [0], [1], [0, 0, 1, 1], [], []>} : vector<128x128xbf16>, vector<128x128xbf16>, vector<128x128xf32> -> vector<128x128xf32>
    %26 = arith.truncf %25 : vector<128x128xf32> to vector<128x128xbf16>
    %cst_21 = arith.constant dense<0.000000e+00> : vector<128x128xf32>
    %27 = tpu.matmul %0, %26, %cst_21 {dimension_numbers = #tpu.dot_dimension_numbers<[1], [0], [0], [1], [0, 0, 1, 1], [], []>} : vector<128x128xbf16>, vector<128x128xbf16>, vector<128x128xf32> -> vector<128x128xf32>
    %28 = vector.broadcast %23 : vector<1x128xf32> to vector<128x128xf32>
    %29 = arith.addf %27, %28 : vector<128x128xf32>
    %c0_22 = arith.constant 0 : index
    %c0_23 = arith.constant 0 : index
    %30 = vector.load %arg9[%c0_22, %c0_23] : memref<128x128xf32, #tpu.memory_space<vmem>>, vector<128x128xf32>
    tpu.vector_store %arg9[%c0_22, %c0_23], %29 {strides = array<i32>} : memref<128x128xf32, #tpu.memory_space<vmem>>, vector<128x128xf32>,
    return
  }
  func.func @transform_0(%arg0: i32) -> (i32, i32) {
    %c0_i32 = arith.constant 0 : i32
    %c0_i32_0 = arith.constant 0 : i32
    %c0_i32_1 = arith.constant 0 : i32
    return %c0_i32, %c0_i32_0 : i32, i32
  }
  func.func @transform_1(%arg0: i32) -> (i32, i32) {
    %c0_i32 = arith.constant 0 : i32
    %c0_i32_0 = arith.constant 0 : i32
    %c0_i32_1 = arith.constant 0 : i32
    return %c0_i32, %c0_i32_0 : i32, i32
  }
  func.func @transform_2(%arg0: i32) -> (i32, i32) {
    %c0_i32 = arith.constant 0 : i32
    %c0_i32_0 = arith.constant 0 : i32
    %c0_i32_1 = arith.constant 0 : i32
    return %c0_i32, %c0_i32_0 : i32, i32
  }
  func.func @transform_3(%arg0: i32) -> (i32, i32) {
    %c0_i32 = arith.constant 0 : i32
    %c0_i32_0 = arith.constant 0 : i32
    %c0_i32_1 = arith.constant 0 : i32
    return %c0_i32, %c0_i32_0 : i32, i32
  }
  func.func @transform_4(%arg0: i32) -> (i32, i32) {
    %c0_i32 = arith.constant 0 : i32
    %c0_i32_0 = arith.constant 0 : i32
    %c0_i32_1 = arith.constant 0 : i32
    return %c0_i32, %c0_i32_0 : i32, i32
  }
  func.func @transform_5(%arg0: i32) -> (i32, i32) {
    %c0_i32 = arith.constant 0 : i32
    %c0_i32_0 = arith.constant 0 : i32
    %c0_i32_1 = arith.constant 0 : i32
    return %c0_i32, %c0_i32_0 : i32, i32
  }
  func.func @transform_6(%arg0: i32) -> (i32, i32) {
    %c0_i32 = arith.constant 0 : i32
    %c0_i32_0 = arith.constant 0 : i32
    %c0_i32_1 = arith.constant 0 : i32
    return %c0_i32, %c0_i32_0 : i32, i32
  }
  func.func @transform_7(%arg0: i32) -> (i32, i32) {
    %c0_i32 = arith.constant 0 : i32
    %c0_i32_0 = arith.constant 0 : i32
    %c0_i32_1 = arith.constant 0 : i32
    return %c0_i32, %c0_i32_0 : i32, i32
  }
  func.func @transform_8(%arg0: i32) -> (i32, i32) {
    %c0_i32 = arith.constant 0 : i32
    %c0_i32_0 = arith.constant 0 : i32
    %c0_i32_1 = arith.constant 0 : i32
    return %c0_i32, %c0_i32_0 : i32, i32
  }
}

</mosaic_0001>

<llo_original>
// kernel: tpu_custom_call.1
$region0: #{tpu_custom_call.1}
  #allocation0 [shape = 'u32[]', space=smem, size = 0x4, offset = 0x4, fixed_abs, tag = 'smem constant byte address 0x4 - core index']
  #allocation1 [shape = 'u32[144,128]{1,0:T(1,128)}', space=vmem, size = 0x12000, scoped, tag = 'internal scratch']
  %s0 = inlined_call_operand.hbm [shape: bf16[128,128], index: 0, kind: input, shape index: {}]
  %s1 = inlined_call_operand.hbm [shape: f32[128,128], index: 1, kind: input, shape index: {}]
  %s2 = inlined_call_operand.hbm [shape: bf16[128,128], index: 2, kind: input, shape index: {}]
  %s3 = inlined_call_operand.hbm [shape: bf16[128,128], index: 3, kind: input, shape index: {}]
  %s4 = inlined_call_operand.hbm [shape: bf16[128,128], index: 4, kind: input, shape index: {}]
  %s5 = inlined_call_operand.vmem [shape: f32[1,128], index: 5, kind: input, shape index: {}]
  %s6 = inlined_call_operand.vmem [shape: f32[1,128], index: 6, kind: input, shape index: {}]
  %s7 = inlined_call_operand.vmem [shape: f32[1,128], index: 7, kind: input, shape index: {}]
  %s8 = inlined_call_operand.hbm [shape: f32[128,128], index: 8, kind: output, shape index: {}]
  %s9 = sld [smem:[#allocation0]]
  $region62: #{tpu_custom_call.1} parent=0
    _
  %s11 = ssub.s32 1, %s9
  %s12 = scalar_select 0, %s11, %s9
  $region1: #{tpu_custom_call.1} parent=0
    #allocation2 [shape = 'u8[32768]{0}', space=vmem, size = 0x8000, scoped, tag = 'input window, operand 0, single buffered']
    #allocation3 [shape = 's32[1]{0}', space=sflag, size = 0x4, scoped, tag = 'scoped memory for tpu_custom_call.1']
    #allocation4 [shape = 's32[1]{0}', space=sflag, size = 0x4, scoped, tag = 'scoped memory for tpu_custom_call.1']
    #allocation5 [shape = 'u8[65536]{0}', space=vmem, size = 0x10000, scoped, tag = 'input window, operand 1, single buffered']
    #allocation6 [shape = 's32[1]{0}', space=sflag, size = 0x4, scoped, tag = 'scoped memory for tpu_custom_call.1']
    #allocation7 [shape = 'u8[32768]{0}', space=vmem, size = 0x8000, scoped, tag = 'input window, operand 2, single buffered']
    #allocation8 [shape = 'u8[32768]{0}', space=vmem, size = 0x8000, scoped, tag = 'input window, operand 3, single buffered']
    #allocation9 [shape = 's32[1]{0}', space=sflag, size = 0x4, scoped, tag = 'scoped memory for tpu_custom_call.1']
    #allocation10 [shape = 'u8[32768]{0}', space=vmem, size = 0x8000, scoped, tag = 'input window, operand 4, single buffered']
    #allocation11 [shape = 'u8[65536]{0}', space=vmem, size = 0x10000, scoped, tag = 'output window, operand 0, single buffered']
    %13 = vsyncpa [#allocation3], 0
    %14 = vsyncpa [#allocation6], 0
    %15 = vsyncpa [#allocation9], 0
    %16 = vsyncpa [#allocation4], 0
    // Predicated region
    $region2: #{tpu_custom_call.1} parent=1 // pred_check
      _
    $region3: #{tpu_custom_call.1} parent=1 // pred_check_branch
      %18 = sbr.rel (0) target = $region5
    $region4: #{tpu_custom_call.1} parent=1 // pred_region
      %s20 = ssub.s32 1024, 1024
      %21 = vsyncadd [#allocation3], %s20
      %s22 = sshll.u32 [#allocation2], 4
      %s23 = int_to_ptr.vmem [resolvable:$true] %s22
      %28 = dma.hbm_to_vmem [thread:$0]  %s0, 1024, %s23, [#allocation3], 64, 64, 4
    $region5: #{tpu_custom_call.1} parent=1 // pred_fallthru
      _
    // Predicated region
    $region6: #{tpu_custom_call.1} parent=1 // pred_check
      _
    $region7: #{tpu_custom_call.1} parent=1 // pred_check_branch
      %30 = sbr.rel (0) target = $region9
    $region8: #{tpu_custom_call.1} parent=1 // pred_region
      %s32 = ssub.s32 2048, 2048
      %33 = vsyncadd [#allocation6], %s32
      %s34 = sshll.u32 [#allocation5], 4
      %s35 = int_to_ptr.vmem [resolvable:$true] %s34
      %40 = dma.hbm_to_vmem [thread:$0]  %s1, 2048, %s35, [#allocation6], 128, 128, 8
    $region9: #{tpu_custom_call.1} parent=1 // pred_fallthru
      _
    // Predicated region
    $region10: #{tpu_custom_call.1} parent=1 // pred_check
      _
    $region11: #{tpu_custom_call.1} parent=1 // pred_check_branch
      %42 = sbr.rel (0) target = $region13
    $region12: #{tpu_custom_call.1} parent=1 // pred_region
      %s44 = ssub.s32 1024, 1024
      %45 = vsyncadd [#allocation6], %s44
      %s46 = sshll.u32 [#allocation7], 4
      %s47 = int_to_ptr.vmem [resolvable:$true] %s46
      %52 = dma.hbm_to_vmem [thread:$0]  %s2, 1024, %s47, [#allocation6], 64, 64, 4
    $region13: #{tpu_custom_call.1} parent=1 // pred_fallthru
      _
    // Predicated region
    $region14: #{tpu_custom_call.1} parent=1 // pred_check
      _
    $region15: #{tpu_custom_call.1} parent=1 // pred_check_branch
      %54 = sbr.rel (0) target = $region17
    $region16: #{tpu_custom_call.1} parent=1 // pred_region
      %s56 = ssub.s32 1024, 1024
      %57 = vsyncadd [#allocation9], %s56
      %s58 = sshll.u32 [#allocation8], 4
      %s59 = int_to_ptr.vmem [resolvable:$true] %s58
      %64 = dma.hbm_to_vmem [thread:$0]  %s3, 1024, %s59, [#allocation9], 64, 64, 4
    $region17: #{tpu_custom_call.1} parent=1 // pred_fallthru
      _
    // Predicated region
    $region18: #{tpu_custom_call.1} parent=1 // pred_check
      _
    $region19: #{tpu_custom_call.1} parent=1 // pred_check_branch
      %66 = sbr.rel (0) target = $region21
    $region20: #{tpu_custom_call.1} parent=1 // pred_region
      %s68 = ssub.s32 1024, 1024
      %69 = vsyncadd [#allocation9], %s68
      %s70 = sshll.u32 [#allocation10], 4
      %s71 = int_to_ptr.vmem [resolvable:$true] %s70
      %76 = dma.hbm_to_vmem [thread:$0]  %s4, 1024, %s71, [#allocation9], 64, 64, 4
    $region21: #{tpu_custom_call.1} parent=1 // pred_fallthru
      _
    // Predicated region
    $region22: #{tpu_custom_call.1} parent=1 // pred_check
      _
    $region23: #{tpu_custom_call.1} parent=1 // pred_check_branch
      %78 = sbr.rel (0) target = $region25
    $region24: #{tpu_custom_call.1} parent=1 // pred_region
      _
    $region25: #{tpu_custom_call.1} parent=1 // pred_fallthru
      _
    // Predicated region
    $region26: #{tpu_custom_call.1} parent=1 // pred_check
      _
    $region27: #{tpu_custom_call.1} parent=1 // pred_check_branch
      %80 = sbr.rel (0) target = $region29
    $region28: #{tpu_custom_call.1} parent=1 // pred_region
      _
    $region29: #{tpu_custom_call.1} parent=1 // pred_fallthru
      _
    // Predicated region
    $region30: #{tpu_custom_call.1} parent=1 // pred_check
      _
    $region31: #{tpu_custom_call.1} parent=1 // pred_check_branch
      %82 = sbr.rel (0) target = $region33
    $region32: #{tpu_custom_call.1} parent=1 // pred_region
      _
    $region33: #{tpu_custom_call.1} parent=1 // pred_fallthru
      _
    // Predicated region
    $region34: #{tpu_custom_call.1} parent=1 // pred_check
      _
    $region35: #{tpu_custom_call.1} parent=1 // pred_check_branch
      %84 = sbr.rel (0) target = $region37
    $region36: #{tpu_custom_call.1} parent=1 // pred_region
      %85 = dma.done [#allocation3], 1024
    $region37: #{tpu_custom_call.1} parent=1 // pred_fallthru
      _
    // Predicated region
    $region38: #{tpu_custom_call.1} parent=1 // pred_check
      _
    $region39: #{tpu_custom_call.1} parent=1 // pred_check_branch
      %87 = sbr.rel (0) target = $region41
    $region40: #{tpu_custom_call.1} parent=1 // pred_region
      %88 = dma.done [#allocation6], 2048
    $region41: #{tpu_custom_call.1} parent=1 // pred_fallthru
      _
    // Predicated region
    $region42: #{tpu_custom_call.1} parent=1 // pred_check
      _
    $region43: #{tpu_custom_call.1} parent=1 // pred_check_branch
      %90 = sbr.rel (0) target = $region45
    $region44: #{tpu_custom_call.1} parent=1 // pred_region
      %91 = dma.done [#allocation6], 1024
    $region45: #{tpu_custom_call.1} parent=1 // pred_fallthru
      _
    // Predicated region
    $region46: #{tpu_custom_call.1} parent=1 // pred_check
      _
    $region47: #{tpu_custom_call.1} parent=1 // pred_check_branch
      %93 = sbr.rel (0) target = $region49
    $region48: #{tpu_custom_call.1} parent=1 // pred_region
      %94 = dma.done [#allocation9], 1024
    $region49: #{tpu_custom_call.1} parent=1 // pred_fallthru
      _
    // Predicated region
    $region50: #{tpu_custom_call.1} parent=1 // pred_check
      _
    $region51: #{tpu_custom_call.1} parent=1 // pred_check_branch
      %96 = sbr.rel (0) target = $region53
    $region52: #{tpu_custom_call.1} parent=1 // pred_region
      %97 = dma.done [#allocation9], 1024
    $region53: #{tpu_custom_call.1} parent=1 // pred_fallthru
      _
    %v99 = vld [vmem:[#allocation2] sm:$0xf]
    %v100 = vld [vmem:[#allocation2 + $0x4] sm:$0xf]
    %v101 = vld [vmem:[#allocation2 + $0x8] sm:$0xf]
    %v102 = vld [vmem:[#allocation2 + $0xc] sm:$0xf]
    %v103 = vld [vmem:[#allocation2 + $0x10] sm:$0xf]
    %v104 = vld [vmem:[#allocation2 + $0x14] sm:$0xf]
    %v105 = vld [vmem:[#allocation2 + $0x18] sm:$0xf]
    %v106 = vld [vmem:[#allocation2 + $0x1c] sm:$0xf]
    %v107 = vld [vmem:[#allocation2 + $0x20] sm:$0xf]
    %v108 = vld [vmem:[#allocation2 + $0x24] sm:$0xf]
    %v109 = vld [vmem:[#allocation2 + $0x28] sm:$0xf]
    %v110 = vld [vmem:[#allocation2 + $0x2c] sm:$0xf]
    %v111 = vld [vmem:[#allocation2 + $0x30] sm:$0xf]
    %v112 = vld [vmem:[#allocation2 + $0x34] sm:$0xf]
    %v113 = vld [vmem:[#allocation2 + $0x38] sm:$0xf]
    %v114 = vld [vmem:[#allocation2 + $0x3c] sm:$0xf]
    %v115 = vld [vmem:[#allocation5] sm:$0xff]
    %v116 = vld [vmem:[#allocation5 + $0x8] sm:$0xff]
    %v117 = vld [vmem:[#allocation5 + $0x10] sm:$0xff]
    %v118 = vld [vmem:[#allocation5 + $0x18] sm:$0xff]
    %v119 = vld [vmem:[#allocation5 + $0x20] sm:$0xff]
    %v120 = vld [vmem:[#allocation5 + $0x28] sm:$0xff]
    %v121 = vld [vmem:[#allocation5 + $0x30] sm:$0xff]
    %v122 = vld [vmem:[#allocation5 + $0x38] sm:$0xff]
    %v123 = vld [vmem:[#allocation5 + $0x40] sm:$0xff]
    %v124 = vld [vmem:[#allocation5 + $0x48] sm:$0xff]
    %v125 = vld [vmem:[#allocation5 + $0x50] sm:$0xff]
    %v126 = vld [vmem:[#allocation5 + $0x58] sm:$0xff]
    %v127 = vld [vmem:[#allocation5 + $0x60] sm:$0xff]
    %v128 = vld [vmem:[#allocation5 + $0x68] sm:$0xff]
    %v129 = vld [vmem:[#allocation5 + $0x70] sm:$0xff]
    %v130 = vld [vmem:[#allocation5 + $0x78] sm:$0xff]
    %v131 = vld [vmem:[#allocation7] sm:$0xf]
    %v132 = vld [vmem:[#allocation7 + $0x4] sm:$0xf]
    %v133 = vld [vmem:[#allocation7 + $0x8] sm:$0xf]
    %v134 = vld [vmem:[#allocation7 + $0xc] sm:$0xf]
    %v135 = vld [vmem:[#allocation7 + $0x10] sm:$0xf]
    %v136 = vld [vmem:[#allocation7 + $0x14] sm:$0xf]
    %v137 = vld [vmem:[#allocation7 + $0x18] sm:$0xf]
    %v138 = vld [vmem:[#allocation7 + $0x1c] sm:$0xf]
    %v139 = vld [vmem:[#allocation7 + $0x20] sm:$0xf]
    %v140 = vld [vmem:[#allocation7 + $0x24] sm:$0xf]
    %v141 = vld [vmem:[#allocation7 + $0x28] sm:$0xf]
    %v142 = vld [vmem:[#allocation7 + $0x2c] sm:$0xf]
    %v143 = vld [vmem:[#allocation7 + $0x30] sm:$0xf]
    %v144 = vld [vmem:[#allocation7 + $0x34] sm:$0xf]
    %v145 = vld [vmem:[#allocation7 + $0x38] sm:$0xf]
    %v146 = vld [vmem:[#allocation7 + $0x3c] sm:$0xf]
    %v147 = vld [vmem:[%s5] sm:$0x1]
    %v148 = vpack.c.bf16 %v116, %v115
    %v149 = vpack.c.bf16 %v118, %v117
    %v150 = vpack.c.bf16 %v120, %v119
    %v151 = vpack.c.bf16 %v122, %v121
    %v152 = vpack.c.bf16 %v124, %v123
    %v153 = vpack.c.bf16 %v126, %v125
    %v154 = vpack.c.bf16 %v128, %v127
    %v155 = vpack.c.bf16 %v130, %v129
    %v172 = vunpack.c.l.b16 %v131
    %v173 = vunpack.c.l.b16 %v132
    %v174 = vunpack.c.l.b16 %v133
    %v175 = vunpack.c.l.b16 %v134
    %v176 = vunpack.c.l.b16 %v135
    %v177 = vunpack.c.l.b16 %v136
    %v178 = vunpack.c.l.b16 %v137
    %v179 = vunpack.c.l.b16 %v138
    %v180 = vunpack.c.l.b16 %v139
    %v181 = vunpack.c.l.b16 %v140
    %v182 = vunpack.c.l.b16 %v141
    %v183 = vunpack.c.l.b16 %v142
    %v184 = vunpack.c.l.b16 %v143
    %v185 = vunpack.c.l.b16 %v144
    %v186 = vunpack.c.l.b16 %v145
    %v187 = vunpack.c.l.b16 %v146
    %v188 = vpack.c.b16 %v173, %v172
    %v189 = vpack.c.b16 %v175, %v174
    %v190 = vpack.c.b16 %v177, %v176
    %v191 = vpack.c.b16 %v179, %v178
    %v192 = vpack.c.b16 %v181, %v180
    %v193 = vpack.c.b16 %v183, %v182
    %v194 = vpack.c.b16 %v185, %v184
    %v195 = vpack.c.b16 %v187, %v186
    %204 = vmatprep.subr.bf16.mxu0 0
    %205 = vmatpush1.bf16.msra.mxu0 %v188
    %206 = vmatprep.subr.bf16.mxu0 0
    %207 = vmatpush1.bf16.msra.mxu0 %v189
    %208 = vmatprep.subr.bf16.mxu0 0
    %209 = vmatpush1.bf16.msra.mxu0 %v190
    %210 = vmatprep.subr.bf16.mxu0 0
    %211 = vmatpush1.bf16.msra.mxu0 %v191
    %212 = vmatprep.subr.bf16.mxu0 0
    %213 = vmatpush1.bf16.msra.mxu0 %v192
    %214 = vmatprep.subr.bf16.mxu0 0
    %215 = vmatpush1.bf16.msra.mxu0 %v193
    %216 = vmatprep.subr.bf16.mxu0 0
    %217 = vmatpush1.bf16.msra.mxu0 %v194
    %218 = vmatprep.subr.bf16.mxu0 0
    %219 = vmatpush1.bf16.msra.mxu0 %v195
    %220 = vmatprep.subr.bf16.mxu0 0
    %221 = vmatpush1.bf16.msra.mxu0 0
    %222 = vmatprep.subr.bf16.mxu0 0
    %223 = vmatpush1.bf16.msra.mxu0 0
    %224 = vmatprep.subr.bf16.mxu0 0
    %225 = vmatpush1.bf16.msra.mxu0 0
    %226 = vmatprep.subr.bf16.mxu0 0
    %227 = vmatpush1.bf16.msra.mxu0 0
    %228 = vmatprep.subr.bf16.mxu0 0
    %229 = vmatpush1.bf16.msra.mxu0 0
    %230 = vmatprep.subr.bf16.mxu0 0
    %231 = vmatpush1.bf16.msra.mxu0 0
    %232 = vmatprep.subr.bf16.mxu0 0
    %233 = vmatpush1.bf16.msra.mxu0 0
    %234 = vmatprep.subr.bf16.mxu0 0
    %235 = vmatpush1.bf16.msra.mxu0 0
    %236 = vmatprep.mubr.bf16.mxu0 0
    %237 = vmatmul.mubr.bf16.gmra.mrb[0].mxu0 %v148
    %v238 = vpop.f32.mrb[0].mxu0
    %v239 = vadd.f32 0.0, %v238
    %v240 = vpop.f32.mrb[0].mxu0
    %v241 = vpop.f32.mrb[0].mxu0
    %v242 = vadd.f32 0.0, %v241
    %v243 = vpop.f32.mrb[0].mxu0
    %244 = vmatprep.mubr.bf16.mxu0 0
    %245 = vmatmul.mubr.bf16.gmra.mrb[0].mxu0 %v149
    %v246 = vpop.f32.mrb[0].mxu0
    %v247 = vadd.f32 0.0, %v246
    %v248 = vpop.f32.mrb[0].mxu0
    %v249 = vpop.f32.mrb[0].mxu0
    %v250 = vadd.f32 0.0, %v249
    %v251 = vpop.f32.mrb[0].mxu0
    %252 = vmatprep.mubr.bf16.mxu0 0
    %253 = vmatmul.mubr.bf16.gmra.mrb[0].mxu0 %v150
    %v254 = vpop.f32.mrb[0].mxu0
    %v255 = vadd.f32 0.0, %v254
    %v256 = vpop.f32.mrb[0].mxu0
    %v257 = vpop.f32.mrb[0].mxu0
    %v258 = vadd.f32 0.0, %v257
    %v259 = vpop.f32.mrb[0].mxu0
    %260 = vmatprep.mubr.bf16.mxu0 0
    %261 = vmatmul.mubr.bf16.gmra.mrb[0].mxu0 %v151
    %v262 = vpop.f32.mrb[0].mxu0
    %v263 = vadd.f32 0.0, %v262
    %v264 = vpop.f32.mrb[0].mxu0
    %v265 = vpop.f32.mrb[0].mxu0
    %v266 = vadd.f32 0.0, %v265
    %v267 = vpop.f32.mrb[0].mxu0
    %268 = vmatprep.mubr.bf16.mxu0 0
    %269 = vmatmul.mubr.bf16.gmra.mrb[0].mxu0 %v152
    %v270 = vpop.f32.mrb[0].mxu0
    %v271 = vadd.f32 0.0, %v270
    %v272 = vpop.f32.mrb[0].mxu0
    %v273 = vpop.f32.mrb[0].mxu0
    %v274 = vadd.f32 0.0, %v273
    %v275 = vpop.f32.mrb[0].mxu0
    %276 = vmatprep.mubr.bf16.mxu0 0
    %277 = vmatmul.mubr.bf16.gmra.mrb[0].mxu0 %v153
    %v278 = vpop.f32.mrb[0].mxu0
    %v279 = vadd.f32 0.0, %v278
    %v280 = vpop.f32.mrb[0].mxu0
    %v281 = vpop.f32.mrb[0].mxu0
    %v282 = vadd.f32 0.0, %v281
    %v283 = vpop.f32.mrb[0].mxu0
    %284 = vmatprep.mubr.bf16.mxu0 0
    %285 = vmatmul.mubr.bf16.gmra.mrb[0].mxu0 %v154
    %v286 = vpop.f32.mrb[0].mxu0
    %v287 = vadd.f32 0.0, %v286
    %v288 = vpop.f32.mrb[0].mxu0
    %v289 = vpop.f32.mrb[0].mxu0
    %v290 = vadd.f32 0.0, %v289
    %v291 = vpop.f32.mrb[0].mxu0
    %292 = vmatprep.mubr.bf16.mxu0 0
    %293 = vmatmul.mubr.bf16.gmra.mrb[0].mxu0 %v155
    %v294 = vpop.f32.mrb[0].mxu0
    %v295 = vadd.f32 0.0, %v294
    %v296 = vpop.f32.mrb[0].mxu0
    %v297 = vpop.f32.mrb[0].mxu0
    %v298 = vadd.f32 0.0, %v297
    %v299 = vpop.f32.mrb[0].mxu0
    %300 = vdwg.mxu0
    %v301 = vpack.c.bf16 %v242, %v239
    %v302 = vpack.c.bf16 %v250, %v247
    %v303 = vpack.c.bf16 %v258, %v255
    %v304 = vpack.c.bf16 %v266, %v263
    %v305 = vpack.c.bf16 %v274, %v271
    %v306 = vpack.c.bf16 %v282, %v279
    %v307 = vpack.c.bf16 %v290, %v287
    %v308 = vpack.c.bf16 %v298, %v295
    %v310 = vlaneseq
    %v311 = vshrl.u32 %v310, 7
    %v312 = vsub.s32 0, %v311
    %v313 = vrot.slane %v147, %v312
    %v331 = vunpack.c.l.b16 %v99
    %v332 = vunpack.c.l.b16 %v100
    %v333 = vunpack.c.l.b16 %v101
    %v334 = vunpack.c.l.b16 %v102
    %v335 = vunpack.c.l.b16 %v103
    %v336 = vunpack.c.l.b16 %v104
    %v337 = vunpack.c.l.b16 %v105
    %v338 = vunpack.c.l.b16 %v106
    %v339 = vunpack.c.l.b16 %v107
    %v340 = vunpack.c.l.b16 %v108
    %v341 = vunpack.c.l.b16 %v109
    %v342 = vunpack.c.l.b16 %v110
    %v343 = vunpack.c.l.b16 %v111
    %v344 = vunpack.c.l.b16 %v112
    %v345 = vunpack.c.l.b16 %v113
    %v346 = vunpack.c.l.b16 %v114
    %v347 = vpack.c.b16 %v332, %v331
    %v348 = vpack.c.b16 %v334, %v333
    %v349 = vpack.c.b16 %v336, %v335
    %v350 = vpack.c.b16 %v338, %v337
    %v351 = vpack.c.b16 %v340, %v339
    %v352 = vpack.c.b16 %v342, %v341
    %v353 = vpack.c.b16 %v344, %v343
    %v354 = vpack.c.b16 %v346, %v345
    %363 = vmatprep.subr.bf16.mxu0 0
    %364 = vmatpush1.bf16.msra.mxu0 %v301
    %365 = vmatprep.subr.bf16.mxu0 0
    %366 = vmatpush1.bf16.msra.mxu0 %v302
    %367 = vmatprep.subr.bf16.mxu0 0
    %368 = vmatpush1.bf16.msra.mxu0 %v303
    %369 = vmatprep.subr.bf16.mxu0 0
    %370 = vmatpush1.bf16.msra.mxu0 %v304
    %371 = vmatprep.subr.bf16.mxu0 0
    %372 = vmatpush1.bf16.msra.mxu0 %v305
    %373 = vmatprep.subr.bf16.mxu0 0
    %374 = vmatpush1.bf16.msra.mxu0 %v306
    %375 = vmatprep.subr.bf16.mxu0 0
    %376 = vmatpush1.bf16.msra.mxu0 %v307
    %377 = vmatprep.subr.bf16.mxu0 0
    %378 = vmatpush1.bf16.msra.mxu0 %v308
    %379 = vmatprep.subr.bf16.mxu0 0
    %380 = vmatpush1.bf16.msra.mxu0 0
    %381 = vmatprep.subr.bf16.mxu0 0
    %382 = vmatpush1.bf16.msra.mxu0 0
    %383 = vmatprep.subr.bf16.mxu0 0
    %384 = vmatpush1.bf16.msra.mxu0 0
    %385 = vmatprep.subr.bf16.mxu0 0
    %386 = vmatpush1.bf16.msra.mxu0 0
    %387 = vmatprep.subr.bf16.mxu0 0
    %388 = vmatpush1.bf16.msra.mxu0 0
    %389 = vmatprep.subr.bf16.mxu0 0
    %390 = vmatpush1.bf16.msra.mxu0 0
    %391 = vmatprep.subr.bf16.mxu0 0
    %392 = vmatpush1.bf16.msra.mxu0 0
    %393 = vmatprep.subr.bf16.mxu0 0
    %394 = vmatpush1.bf16.msra.mxu0 0
    %395 = vmatprep.mubr.bf16.mxu0 0
    %396 = vmatmul.mubr.bf16.gmra.mrb[0].mxu0 %v347
    %v397 = vpop.f32.mrb[0].mxu0
    %v398 = vadd.f32 %v313, %v397
    %v399 = vpop.f32.mrb[0].mxu0
    %v400 = vpop.f32.mrb[0].mxu0
    %v401 = vadd.f32 %v313, %v400
    %v402 = vpop.f32.mrb[0].mxu0
    %403 = vmatprep.mubr.bf16.mxu0 0
    %404 = vmatmul.mubr.bf16.gmra.mrb[0].mxu0 %v348
    %v405 = vpop.f32.mrb[0].mxu0
    %v406 = vadd.f32 %v313, %v405
    %v407 = vpop.f32.mrb[0].mxu0
    %v408 = vpop.f32.mrb[0].mxu0
    %v409 = vadd.f32 %v313, %v408
    %v410 = vpop.f32.mrb[0].mxu0
    %411 = vmatprep.mubr.bf16.mxu0 0
    %412 = vmatmul.mubr.bf16.gmra.mrb[0].mxu0 %v349
    %v413 = vpop.f32.mrb[0].mxu0
    %v414 = vadd.f32 %v313, %v413
    %v415 = vpop.f32.mrb[0].mxu0
    %v416 = vpop.f32.mrb[0].mxu0
    %v417 = vadd.f32 %v313, %v416
    %v418 = vpop.f32.mrb[0].mxu0
    %419 = vmatprep.mubr.bf16.mxu0 0
    %420 = vmatmul.mubr.bf16.gmra.mrb[0].mxu0 %v350
    %v421 = vpop.f32.mrb[0].mxu0
    %v422 = vadd.f32 %v313, %v421
    %v423 = vpop.f32.mrb[0].mxu0
    %v424 = vpop.f32.mrb[0].mxu0
    %v425 = vadd.f32 %v313, %v424
    %v426 = vpop.f32.mrb[0].mxu0
    %427 = vmatprep.mubr.bf16.mxu0 0
    %428 = vmatmul.mubr.bf16.gmra.mrb[0].mxu0 %v351
    %v429 = vpop.f32.mrb[0].mxu0
    %v430 = vadd.f32 %v313, %v429
    %v431 = vpop.f32.mrb[0].mxu0
    %v432 = vpop.f32.mrb[0].mxu0
    %v433 = vadd.f32 %v313, %v432
    %v434 = vpop.f32.mrb[0].mxu0
    %435 = vmatprep.mubr.bf16.mxu0 0
    %436 = vmatmul.mubr.bf16.gmra.mrb[0].mxu0 %v352
    %v437 = vpop.f32.mrb[0].mxu0
    %v438 = vadd.f32 %v313, %v437
    %v439 = vpop.f32.mrb[0].mxu0
    %v440 = vpop.f32.mrb[0].mxu0
    %v441 = vadd.f32 %v313, %v440
    %v442 = vpop.f32.mrb[0].mxu0
    %443 = vmatprep.mubr.bf16.mxu0 0
    %444 = vmatmul.mubr.bf16.gmra.mrb[0].mxu0 %v353
    %v445 = vpop.f32.mrb[0].mxu0
    %v446 = vadd.f32 %v313, %v445
    %v447 = vpop.f32.mrb[0].mxu0
    %v448 = vpop.f32.mrb[0].mxu0
    %v449 = vadd.f32 %v313, %v448
    %v450 = vpop.f32.mrb[0].mxu0
    %451 = vmatprep.mubr.bf16.mxu0 0
    %452 = vmatmul.mubr.bf16.gmra.mrb[0].mxu0 %v354
    %v453 = vpop.f32.mrb[0].mxu0
    %v454 = vadd.f32 %v313, %v453
    %v455 = vpop.f32.mrb[0].mxu0
    %v456 = vpop.f32.mrb[0].mxu0
    %v457 = vadd.f32 %v313, %v456
    %v458 = vpop.f32.mrb[0].mxu0
    %459 = vdwg.mxu0
    %v460 = vmax.f32 %v398, 0.0
    %v461 = vmax.f32 %v401, 0.0
    %v462 = vmax.f32 %v406, 0.0
    %v463 = vmax.f32 %v409, 0.0
    %v464 = vmax.f32 %v414, 0.0
    %v465 = vmax.f32 %v417, 0.0
    %v466 = vmax.f32 %v422, 0.0
    %v467 = vmax.f32 %v425, 0.0
    %v468 = vmax.f32 %v430, 0.0
    %v469 = vmax.f32 %v433, 0.0
    %v470 = vmax.f32 %v438, 0.0
    %v471 = vmax.f32 %v441, 0.0
    %v472 = vmax.f32 %v446, 0.0
    %v473 = vmax.f32 %v449, 0.0
    %v474 = vmax.f32 %v454, 0.0
    %v475 = vmax.f32 %v457, 0.0
    %v476 = vld [vmem:[#allocation8] sm:$0xf]
    %v477 = vld [vmem:[#allocation8 + $0x4] sm:$0xf]
    %v478 = vld [vmem:[#allocation8 + $0x8] sm:$0xf]
    %v479 = vld [vmem:[#allocation8 + $0xc] sm:$0xf]
    %v480 = vld [vmem:[#allocation8 + $0x10] sm:$0xf]
    %v481 = vld [vmem:[#allocation8 + $0x14] sm:$0xf]
    %v482 = vld [vmem:[#allocation8 + $0x18] sm:$0xf]
    %v483 = vld [vmem:[#allocation8 + $0x1c] sm:$0xf]
    %v484 = vld [vmem:[#allocation8 + $0x20] sm:$0xf]
    %v485 = vld [vmem:[#allocation8 + $0x24] sm:$0xf]
    %v486 = vld [vmem:[#allocation8 + $0x28] sm:$0xf]
    %v487 = vld [vmem:[#allocation8 + $0x2c] sm:$0xf]
    %v488 = vld [vmem:[#allocation8 + $0x30] sm:$0xf]
    %v489 = vld [vmem:[#allocation8 + $0x34] sm:$0xf]
    %v490 = vld [vmem:[#allocation8 + $0x38] sm:$0xf]
    %v491 = vld [vmem:[#allocation8 + $0x3c] sm:$0xf]
    %v492 = vld [vmem:[%s6] sm:$0x1]
    %v493 = vpack.c.bf16 %v461, %v460
    %v494 = vpack.c.bf16 %v463, %v462
    %v495 = vpack.c.bf16 %v465, %v464
    %v496 = vpack.c.bf16 %v467, %v466
    %v497 = vpack.c.bf16 %v469, %v468
    %v498 = vpack.c.bf16 %v471, %v470
    %v499 = vpack.c.bf16 %v473, %v472
    %v500 = vpack.c.bf16 %v475, %v474
    %v517 = vunpack.c.l.b16 %v476
    %v518 = vunpack.c.l.b16 %v477
    %v519 = vunpack.c.l.b16 %v478
    %v520 = vunpack.c.l.b16 %v479
    %v521 = vunpack.c.l.b16 %v480
    %v522 = vunpack.c.l.b16 %v481
    %v523 = vunpack.c.l.b16 %v482
    %v524 = vunpack.c.l.b16 %v483
    %v525 = vunpack.c.l.b16 %v484
    %v526 = vunpack.c.l.b16 %v485
    %v527 = vunpack.c.l.b16 %v486
    %v528 = vunpack.c.l.b16 %v487
    %v529 = vunpack.c.l.b16 %v488
    %v530 = vunpack.c.l.b16 %v489
    %v531 = vunpack.c.l.b16 %v490
    %v532 = vunpack.c.l.b16 %v491
    %v533 = vpack.c.b16 %v518, %v517
    %v534 = vpack.c.b16 %v520, %v519
    %v535 = vpack.c.b16 %v522, %v521
    %v536 = vpack.c.b16 %v524, %v523
    %v537 = vpack.c.b16 %v526, %v525
    %v538 = vpack.c.b16 %v528, %v527
    %v539 = vpack.c.b16 %v530, %v529
    %v540 = vpack.c.b16 %v532, %v531
    %549 = vmatprep.subr.bf16.mxu0 0
    %550 = vmatpush1.bf16.msra.mxu0 %v533
    %551 = vmatprep.subr.bf16.mxu0 0
    %552 = vmatpush1.bf16.msra.mxu0 %v534
    %553 = vmatprep.subr.bf16.mxu0 0
    %554 = vmatpush1.bf16.msra.mxu0 %v535
    %555 = vmatprep.subr.bf16.mxu0 0
    %556 = vmatpush1.bf16.msra.mxu0 %v536
    %557 = vmatprep.subr.bf16.mxu0 0
    %558 = vmatpush1.bf16.msra.mxu0 %v537
    %559 = vmatprep.subr.bf16.mxu0 0
    %560 = vmatpush1.bf16.msra.mxu0 %v538
    %561 = vmatprep.subr.bf16.mxu0 0
    %562 = vmatpush1.bf16.msra.mxu0 %v539
    %563 = vmatprep.subr.bf16.mxu0 0
    %564 = vmatpush1.bf16.msra.mxu0 %v540
    %565 = vmatprep.subr.bf16.mxu0 0
    %566 = vmatpush1.bf16.msra.mxu0 0
    %567 = vmatprep.subr.bf16.mxu0 0
    %568 = vmatpush1.bf16.msra.mxu0 0
    %569 = vmatprep.subr.bf16.mxu0 0
    %570 = vmatpush1.bf16.msra.mxu0 0
    %571 = vmatprep.subr.bf16.mxu0 0
    %572 = vmatpush1.bf16.msra.mxu0 0
    %573 = vmatprep.subr.bf16.mxu0 0
    %574 = vmatpush1.bf16.msra.mxu0 0
    %575 = vmatprep.subr.bf16.mxu0 0
    %576 = vmatpush1.bf16.msra.mxu0 0
    %577 = vmatprep.subr.bf16.mxu0 0
    %578 = vmatpush1.bf16.msra.mxu0 0
    %579 = vmatprep.subr.bf16.mxu0 0
    %580 = vmatpush1.bf16.msra.mxu0 0
    %581 = vmatprep.mubr.bf16.mxu0 0
    %582 = vmatmul.mubr.bf16.gmra.mrb[0].mxu0 %v493
    %v583 = vpop.f32.mrb[0].mxu0
    %v584 = vadd.f32 0.0, %v583
    %v585 = vpop.f32.mrb[0].mxu0
    %v586 = vpop.f32.mrb[0].mxu0
    %v587 = vadd.f32 0.0, %v586
    %v588 = vpop.f32.mrb[0].mxu0
    %589 = vmatprep.mubr.bf16.mxu0 0
    %590 = vmatmul.mubr.bf16.gmra.mrb[0].mxu0 %v494
    %v591 = vpop.f32.mrb[0].mxu0
    %v592 = vadd.f32 0.0, %v591
    %v593 = vpop.f32.mrb[0].mxu0
    %v594 = vpop.f32.mrb[0].mxu0
    %v595 = vadd.f32 0.0, %v594
    %v596 = vpop.f32.mrb[0].mxu0
    %597 = vmatprep.mubr.bf16.mxu0 0
    %598 = vmatmul.mubr.bf16.gmra.mrb[0].mxu0 %v495
    %v599 = vpop.f32.mrb[0].mxu0
    %v600 = vadd.f32 0.0, %v599
    %v601 = vpop.f32.mrb[0].mxu0
    %v602 = vpop.f32.mrb[0].mxu0
    %v603 = vadd.f32 0.0, %v602
    %v604 = vpop.f32.mrb[0].mxu0
    %605 = vmatprep.mubr.bf16.mxu0 0
    %606 = vmatmul.mubr.bf16.gmra.mrb[0].mxu0 %v496
    %v607 = vpop.f32.mrb[0].mxu0
    %v608 = vadd.f32 0.0, %v607
    %v609 = vpop.f32.mrb[0].mxu0
    %v610 = vpop.f32.mrb[0].mxu0
    %v611 = vadd.f32 0.0, %v610
    %v612 = vpop.f32.mrb[0].mxu0
    %613 = vmatprep.mubr.bf16.mxu0 0
    %614 = vmatmul.mubr.bf16.gmra.mrb[0].mxu0 %v497
    %v615 = vpop.f32.mrb[0].mxu0
    %v616 = vadd.f32 0.0, %v615
    %v617 = vpop.f32.mrb[0].mxu0
    %v618 = vpop.f32.mrb[0].mxu0
    %v619 = vadd.f32 0.0, %v618
    %v620 = vpop.f32.mrb[0].mxu0
    %621 = vmatprep.mubr.bf16.mxu0 0
    %622 = vmatmul.mubr.bf16.gmra.mrb[0].mxu0 %v498
    %v623 = vpop.f32.mrb[0].mxu0
    %v624 = vadd.f32 0.0, %v623
    %v625 = vpop.f32.mrb[0].mxu0
    %v626 = vpop.f32.mrb[0].mxu0
    %v627 = vadd.f32 0.0, %v626
    %v628 = vpop.f32.mrb[0].mxu0
    %629 = vmatprep.mubr.bf16.mxu0 0
    %630 = vmatmul.mubr.bf16.gmra.mrb[0].mxu0 %v499
    %v631 = vpop.f32.mrb[0].mxu0
    %v632 = vadd.f32 0.0, %v631
    %v633 = vpop.f32.mrb[0].mxu0
    %v634 = vpop.f32.mrb[0].mxu0
    %v635 = vadd.f32 0.0, %v634
    %v636 = vpop.f32.mrb[0].mxu0
    %637 = vmatprep.mubr.bf16.mxu0 0
    %638 = vmatmul.mubr.bf16.gmra.mrb[0].mxu0 %v500
    %v639 = vpop.f32.mrb[0].mxu0
    %v640 = vadd.f32 0.0, %v639
    %v641 = vpop.f32.mrb[0].mxu0
    %v642 = vpop.f32.mrb[0].mxu0
    %v643 = vadd.f32 0.0, %v642
    %v644 = vpop.f32.mrb[0].mxu0
    %645 = vdwg.mxu0
    %v646 = vpack.c.bf16 %v587, %v584
    %v647 = vpack.c.bf16 %v595, %v592
    %v648 = vpack.c.bf16 %v603, %v600
    %v649 = vpack.c.bf16 %v611, %v608
    %v650 = vpack.c.bf16 %v619, %v616
    %v651 = vpack.c.bf16 %v627, %v624
    %v652 = vpack.c.bf16 %v635, %v632
    %v653 = vpack.c.bf16 %v643, %v640
    %v655 = vlaneseq
    %v656 = vshrl.u32 %v655, 7
    %v657 = vsub.s32 0, %v656
    %v658 = vrot.slane %v492, %v657
    %660 = vmatprep.subr.bf16.mxu0 0
    %661 = vmatpush1.bf16.msra.mxu0 %v646
    %662 = vmatprep.subr.bf16.mxu0 0
    %663 = vmatpush1.bf16.msra.mxu0 %v647
    %664 = vmatprep.subr.bf16.mxu0 0
    %665 = vmatpush1.bf16.msra.mxu0 %v648
    %666 = vmatprep.subr.bf16.mxu0 0
    %667 = vmatpush1.bf16.msra.mxu0 %v649
    %668 = vmatprep.subr.bf16.mxu0 0
    %669 = vmatpush1.bf16.msra.mxu0 %v650
    %670 = vmatprep.subr.bf16.mxu0 0
    %671 = vmatpush1.bf16.msra.mxu0 %v651
    %672 = vmatprep.subr.bf16.mxu0 0
    %673 = vmatpush1.bf16.msra.mxu0 %v652
    %674 = vmatprep.subr.bf16.mxu0 0
    %675 = vmatpush1.bf16.msra.mxu0 %v653
    %676 = vmatprep.subr.bf16.mxu0 0
    %677 = vmatpush1.bf16.msra.mxu0 0
    %678 = vmatprep.subr.bf16.mxu0 0
    %679 = vmatpush1.bf16.msra.mxu0 0
    %680 = vmatprep.subr.bf16.mxu0 0
    %681 = vmatpush1.bf16.msra.mxu0 0
    %682 = vmatprep.subr.bf16.mxu0 0
    %683 = vmatpush1.bf16.msra.mxu0 0
    %684 = vmatprep.subr.bf16.mxu0 0
    %685 = vmatpush1.bf16.msra.mxu0 0
    %686 = vmatprep.subr.bf16.mxu0 0
    %687 = vmatpush1.bf16.msra.mxu0 0
    %688 = vmatprep.subr.bf16.mxu0 0
    %689 = vmatpush1.bf16.msra.mxu0 0
    %690 = vmatprep.subr.bf16.mxu0 0
    %691 = vmatpush1.bf16.msra.mxu0 0
    %692 = vmatprep.mubr.bf16.mxu0 0
    %693 = vmatmul.mubr.bf16.gmra.mrb[0].mxu0 %v347
    %v694 = vpop.f32.mrb[0].mxu0
    %v695 = vadd.f32 %v658, %v694
    %v696 = vpop.f32.mrb[0].mxu0
    %v697 = vpop.f32.mrb[0].mxu0
    %v698 = vadd.f32 %v658, %v697
    %v699 = vpop.f32.mrb[0].mxu0
    %700 = vmatprep.mubr.bf16.mxu0 0
    %701 = vmatmul.mubr.bf16.gmra.mrb[0].mxu0 %v348
    %v702 = vpop.f32.mrb[0].mxu0
    %v703 = vadd.f32 %v658, %v702
    %v704 = vpop.f32.mrb[0].mxu0
    %v705 = vpop.f32.mrb[0].mxu0
    %v706 = vadd.f32 %v658, %v705
    %v707 = vpop.f32.mrb[0].mxu0
    %708 = vmatprep.mubr.bf16.mxu0 0
    %709 = vmatmul.mubr.bf16.gmra.mrb[0].mxu0 %v349
    %v710 = vpop.f32.mrb[0].mxu0
    %v711 = vadd.f32 %v658, %v710
    %v712 = vpop.f32.mrb[0].mxu0
    %v713 = vpop.f32.mrb[0].mxu0
    %v714 = vadd.f32 %v658, %v713
    %v715 = vpop.f32.mrb[0].mxu0
    %716 = vmatprep.mubr.bf16.mxu0 0
    %717 = vmatmul.mubr.bf16.gmra.mrb[0].mxu0 %v350
    %v718 = vpop.f32.mrb[0].mxu0
    %v719 = vadd.f32 %v658, %v718
    %v720 = vpop.f32.mrb[0].mxu0
    %v721 = vpop.f32.mrb[0].mxu0
    %v722 = vadd.f32 %v658, %v721
    %v723 = vpop.f32.mrb[0].mxu0
    %724 = vmatprep.mubr.bf16.mxu0 0
    %725 = vmatmul.mubr.bf16.gmra.mrb[0].mxu0 %v351
    %v726 = vpop.f32.mrb[0].mxu0
    %v727 = vadd.f32 %v658, %v726
    %v728 = vpop.f32.mrb[0].mxu0
    %v729 = vpop.f32.mrb[0].mxu0
    %v730 = vadd.f32 %v658, %v729
    %v731 = vpop.f32.mrb[0].mxu0
    %732 = vmatprep.mubr.bf16.mxu0 0
    %733 = vmatmul.mubr.bf16.gmra.mrb[0].mxu0 %v352
    %v734 = vpop.f32.mrb[0].mxu0
    %v735 = vadd.f32 %v658, %v734
    %v736 = vpop.f32.mrb[0].mxu0
    %v737 = vpop.f32.mrb[0].mxu0
    %v738 = vadd.f32 %v658, %v737
    %v739 = vpop.f32.mrb[0].mxu0
    %740 = vmatprep.mubr.bf16.mxu0 0
    %741 = vmatmul.mubr.bf16.gmra.mrb[0].mxu0 %v353
    %v742 = vpop.f32.mrb[0].mxu0
    %v743 = vadd.f32 %v658, %v742
    %v744 = vpop.f32.mrb[0].mxu0
    %v745 = vpop.f32.mrb[0].mxu0
    %v746 = vadd.f32 %v658, %v745
    %v747 = vpop.f32.mrb[0].mxu0
    %748 = vmatprep.mubr.bf16.mxu0 0
    %749 = vmatmul.mubr.bf16.gmra.mrb[0].mxu0 %v354
    %v750 = vpop.f32.mrb[0].mxu0
    %v751 = vadd.f32 %v658, %v750
    %v752 = vpop.f32.mrb[0].mxu0
    %v753 = vpop.f32.mrb[0].mxu0
    %v754 = vadd.f32 %v658, %v753
    %v755 = vpop.f32.mrb[0].mxu0
    %756 = vdwg.mxu0
    %v757 = vmax.f32 %v695, 0.0
    %v758 = vmax.f32 %v698, 0.0
    %v759 = vmax.f32 %v703, 0.0
    %v760 = vmax.f32 %v706, 0.0
    %v761 = vmax.f32 %v711, 0.0
    %v762 = vmax.f32 %v714, 0.0
    %v763 = vmax.f32 %v719, 0.0
    %v764 = vmax.f32 %v722, 0.0
    %v765 = vmax.f32 %v727, 0.0
    %v766 = vmax.f32 %v730, 0.0
    %v767 = vmax.f32 %v735, 0.0
    %v768 = vmax.f32 %v738, 0.0
    %v769 = vmax.f32 %v743, 0.0
    %v770 = vmax.f32 %v746, 0.0
    %v771 = vmax.f32 %v751, 0.0
    %v772 = vmax.f32 %v754, 0.0
    %v773 = vld [vmem:[#allocation10] sm:$0xf]
    %v774 = vld [vmem:[#allocation10 + $0x4] sm:$0xf]
    %v775 = vld [vmem:[#allocation10 + $0x8] sm:$0xf]
    %v776 = vld [vmem:[#allocation10 + $0xc] sm:$0xf]
    %v777 = vld [vmem:[#allocation10 + $0x10] sm:$0xf]
    %v778 = vld [vmem:[#allocation10 + $0x14] sm:$0xf]
    %v779 = vld [vmem:[#allocation10 + $0x18] sm:$0xf]
    %v780 = vld [vmem:[#allocation10 + $0x1c] sm:$0xf]
    %v781 = vld [vmem:[#allocation10 + $0x20] sm:$0xf]
    %v782 = vld [vmem:[#allocation10 + $0x24] sm:$0xf]
    %v783 = vld [vmem:[#allocation10 + $0x28] sm:$0xf]
    %v784 = vld [vmem:[#allocation10 + $0x2c] sm:$0xf]
    %v785 = vld [vmem:[#allocation10 + $0x30] sm:$0xf]
    %v786 = vld [vmem:[#allocation10 + $0x34] sm:$0xf]
    %v787 = vld [vmem:[#allocation10 + $0x38] sm:$0xf]
    %v788 = vld [vmem:[#allocation10 + $0x3c] sm:$0xf]
    %v789 = vld [vmem:[%s7] sm:$0x1]
    %v790 = vpack.c.bf16 %v758, %v757
    %v791 = vpack.c.bf16 %v760, %v759
    %v792 = vpack.c.bf16 %v762, %v761
    %v793 = vpack.c.bf16 %v764, %v763
    %v794 = vpack.c.bf16 %v766, %v765
    %v795 = vpack.c.bf16 %v768, %v767
    %v796 = vpack.c.bf16 %v770, %v769
    %v797 = vpack.c.bf16 %v772, %v771
    %v814 = vunpack.c.l.b16 %v773
    %v815 = vunpack.c.l.b16 %v774
    %v816 = vunpack.c.l.b16 %v775
    %v817 = vunpack.c.l.b16 %v776
    %v818 = vunpack.c.l.b16 %v777
    %v819 = vunpack.c.l.b16 %v778
    %v820 = vunpack.c.l.b16 %v779
    %v821 = vunpack.c.l.b16 %v780
    %v822 = vunpack.c.l.b16 %v781
    %v823 = vunpack.c.l.b16 %v782
    %v824 = vunpack.c.l.b16 %v783
    %v825 = vunpack.c.l.b16 %v784
    %v826 = vunpack.c.l.b16 %v785
    %v827 = vunpack.c.l.b16 %v786
    %v828 = vunpack.c.l.b16 %v787
    %v829 = vunpack.c.l.b16 %v788
    %v830 = vpack.c.b16 %v815, %v814
    %v831 = vpack.c.b16 %v817, %v816
    %v832 = vpack.c.b16 %v819, %v818
    %v833 = vpack.c.b16 %v821, %v820
    %v834 = vpack.c.b16 %v823, %v822
    %v835 = vpack.c.b16 %v825, %v824
    %v836 = vpack.c.b16 %v827, %v826
    %v837 = vpack.c.b16 %v829, %v828
    %846 = vmatprep.subr.bf16.mxu0 0
    %847 = vmatpush1.bf16.msra.mxu0 %v830
    %848 = vmatprep.subr.bf16.mxu0 0
    %849 = vmatpush1.bf16.msra.mxu0 %v831
    %850 = vmatprep.subr.bf16.mxu0 0
    %851 = vmatpush1.bf16.msra.mxu0 %v832
    %852 = vmatprep.subr.bf16.mxu0 0
    %853 = vmatpush1.bf16.msra.mxu0 %v833
    %854 = vmatprep.subr.bf16.mxu0 0
    %855 = vmatpush1.bf16.msra.mxu0 %v834
    %856 = vmatprep.subr.bf16.mxu0 0
    %857 = vmatpush1.bf16.msra.mxu0 %v835
    %858 = vmatprep.subr.bf16.mxu0 0
    %859 = vmatpush1.bf16.msra.mxu0 %v836
    %860 = vmatprep.subr.bf16.mxu0 0
    %861 = vmatpush1.bf16.msra.mxu0 %v837
    %862 = vmatprep.subr.bf16.mxu0 0
    %863 = vmatpush1.bf16.msra.mxu0 0
    %864 = vmatprep.subr.bf16.mxu0 0
    %865 = vmatpush1.bf16.msra.mxu0 0
    %866 = vmatprep.subr.bf16.mxu0 0
    %867 = vmatpush1.bf16.msra.mxu0 0
    %868 = vmatprep.subr.bf16.mxu0 0
    %869 = vmatpush1.bf16.msra.mxu0 0
    %870 = vmatprep.subr.bf16.mxu0 0
    %871 = vmatpush1.bf16.msra.mxu0 0
    %872 = vmatprep.subr.bf16.mxu0 0
    %873 = vmatpush1.bf16.msra.mxu0 0
    %874 = vmatprep.subr.bf16.mxu0 0
    %875 = vmatpush1.bf16.msra.mxu0 0
    %876 = vmatprep.subr.bf16.mxu0 0
    %877 = vmatpush1.bf16.msra.mxu0 0
    %878 = vmatprep.mubr.bf16.mxu0 0
    %879 = vmatmul.mubr.bf16.gmra.mrb[0].mxu0 %v790
    %v880 = vpop.f32.mrb[0].mxu0
    %v881 = vadd.f32 0.0, %v880
    %v882 = vpop.f32.mrb[0].mxu0
    %v883 = vpop.f32.mrb[0].mxu0
    %v884 = vadd.f32 0.0, %v883
    %v885 = vpop.f32.mrb[0].mxu0
    %886 = vmatprep.mubr.bf16.mxu0 0
    %887 = vmatmul.mubr.bf16.gmra.mrb[0].mxu0 %v791
    %v888 = vpop.f32.mrb[0].mxu0
    %v889 = vadd.f32 0.0, %v888
    %v890 = vpop.f32.mrb[0].mxu0
    %v891 = vpop.f32.mrb[0].mxu0
    %v892 = vadd.f32 0.0, %v891
    %v893 = vpop.f32.mrb[0].mxu0
    %894 = vmatprep.mubr.bf16.mxu0 0
    %895 = vmatmul.mubr.bf16.gmra.mrb[0].mxu0 %v792
    %v896 = vpop.f32.mrb[0].mxu0
    %v897 = vadd.f32 0.0, %v896
    %v898 = vpop.f32.mrb[0].mxu0
    %v899 = vpop.f32.mrb[0].mxu0
    %v900 = vadd.f32 0.0, %v899
    %v901 = vpop.f32.mrb[0].mxu0
    %902 = vmatprep.mubr.bf16.mxu0 0
    %903 = vmatmul.mubr.bf16.gmra.mrb[0].mxu0 %v793
    %v904 = vpop.f32.mrb[0].mxu0
    %v905 = vadd.f32 0.0, %v904
    %v906 = vpop.f32.mrb[0].mxu0
    %v907 = vpop.f32.mrb[0].mxu0
    %v908 = vadd.f32 0.0, %v907
    %v909 = vpop.f32.mrb[0].mxu0
    %910 = vmatprep.mubr.bf16.mxu0 0
    %911 = vmatmul.mubr.bf16.gmra.mrb[0].mxu0 %v794
    %v912 = vpop.f32.mrb[0].mxu0
    %v913 = vadd.f32 0.0, %v912
    %v914 = vpop.f32.mrb[0].mxu0
    %v915 = vpop.f32.mrb[0].mxu0
    %v916 = vadd.f32 0.0, %v915
    %v917 = vpop.f32.mrb[0].mxu0
    %918 = vmatprep.mubr.bf16.mxu0 0
    %919 = vmatmul.mubr.bf16.gmra.mrb[0].mxu0 %v795
    %v920 = vpop.f32.mrb[0].mxu0
    %v921 = vadd.f32 0.0, %v920
    %v922 = vpop.f32.mrb[0].mxu0
    %v923 = vpop.f32.mrb[0].mxu0
    %v924 = vadd.f32 0.0, %v923
    %v925 = vpop.f32.mrb[0].mxu0
    %926 = vmatprep.mubr.bf16.mxu0 0
    %927 = vmatmul.mubr.bf16.gmra.mrb[0].mxu0 %v796
    %v928 = vpop.f32.mrb[0].mxu0
    %v929 = vadd.f32 0.0, %v928
    %v930 = vpop.f32.mrb[0].mxu0
    %v931 = vpop.f32.mrb[0].mxu0
    %v932 = vadd.f32 0.0, %v931
    %v933 = vpop.f32.mrb[0].mxu0
    %934 = vmatprep.mubr.bf16.mxu0 0
    %935 = vmatmul.mubr.bf16.gmra.mrb[0].mxu0 %v797
    %v936 = vpop.f32.mrb[0].mxu0
    %v937 = vadd.f32 0.0, %v936
    %v938 = vpop.f32.mrb[0].mxu0
    %v939 = vpop.f32.mrb[0].mxu0
    %v940 = vadd.f32 0.0, %v939
    %v941 = vpop.f32.mrb[0].mxu0
    %942 = vdwg.mxu0
    %v943 = vpack.c.bf16 %v884, %v881
    %v944 = vpack.c.bf16 %v892, %v889
    %v945 = vpack.c.bf16 %v900, %v897
    %v946 = vpack.c.bf16 %v908, %v905
    %v947 = vpack.c.bf16 %v916, %v913
    %v948 = vpack.c.bf16 %v924, %v921
    %v949 = vpack.c.bf16 %v932, %v929
    %v950 = vpack.c.bf16 %v940, %v937
    %v952 = vlaneseq
    %v953 = vshrl.u32 %v952, 7
    %v954 = vsub.s32 0, %v953
    %v955 = vrot.slane %v789, %v954
    %957 = vmatprep.subr.bf16.mxu0 0
    %958 = vmatpush1.bf16.msra.mxu0 %v943
    %959 = vmatprep.subr.bf16.mxu0 0
    %960 = vmatpush1.bf16.msra.mxu0 %v944
    %961 = vmatprep.subr.bf16.mxu0 0
    %962 = vmatpush1.bf16.msra.mxu0 %v945
    %963 = vmatprep.subr.bf16.mxu0 0
    %964 = vmatpush1.bf16.msra.mxu0 %v946
    %965 = vmatprep.subr.bf16.mxu0 0
    %966 = vmatpush1.bf16.msra.mxu0 %v947
    %967 = vmatprep.subr.bf16.mxu0 0
    %968 = vmatpush1.bf16.msra.mxu0 %v948
    %969 = vmatprep.subr.bf16.mxu0 0
    %970 = vmatpush1.bf16.msra.mxu0 %v949
    %971 = vmatprep.subr.bf16.mxu0 0
    %972 = vmatpush1.bf16.msra.mxu0 %v950
    %973 = vmatprep.subr.bf16.mxu0 0
    %974 = vmatpush1.bf16.msra.mxu0 0
    %975 = vmatprep.subr.bf16.mxu0 0
    %976 = vmatpush1.bf16.msra.mxu0 0
    %977 = vmatprep.subr.bf16.mxu0 0
    %978 = vmatpush1.bf16.msra.mxu0 0
    %979 = vmatprep.subr.bf16.mxu0 0
    %980 = vmatpush1.bf16.msra.mxu0 0
    %981 = vmatprep.subr.bf16.mxu0 0
    %982 = vmatpush1.bf16.msra.mxu0 0
    %983 = vmatprep.subr.bf16.mxu0 0
    %984 = vmatpush1.bf16.msra.mxu0 0
    %985 = vmatprep.subr.bf16.mxu0 0
    %986 = vmatpush1.bf16.msra.mxu0 0
    %987 = vmatprep.subr.bf16.mxu0 0
    %988 = vmatpush1.bf16.msra.mxu0 0
    %989 = vmatprep.mubr.bf16.mxu0 0
    %990 = vmatmul.mubr.bf16.gmra.mrb[0].mxu0 %v347
    %v991 = vpop.f32.mrb[0].mxu0
    %v992 = vadd.f32 %v955, %v991
    %v993 = vpop.f32.mrb[0].mxu0
    %v994 = vpop.f32.mrb[0].mxu0
    %v995 = vadd.f32 %v955, %v994
    %v996 = vpop.f32.mrb[0].mxu0
    %997 = vmatprep.mubr.bf16.mxu0 0
    %998 = vmatmul.mubr.bf16.gmra.mrb[0].mxu0 %v348
    %v999 = vpop.f32.mrb[0].mxu0
    %v1000 = vadd.f32 %v955, %v999
    %v1001 = vpop.f32.mrb[0].mxu0
    %v1002 = vpop.f32.mrb[0].mxu0
    %v1003 = vadd.f32 %v955, %v1002
    %v1004 = vpop.f32.mrb[0].mxu0
    %1005 = vmatprep.mubr.bf16.mxu0 0
    %1006 = vmatmul.mubr.bf16.gmra.mrb[0].mxu0 %v349
    %v1007 = vpop.f32.mrb[0].mxu0
    %v1008 = vadd.f32 %v955, %v1007
    %v1009 = vpop.f32.mrb[0].mxu0
    %v1010 = vpop.f32.mrb[0].mxu0
    %v1011 = vadd.f32 %v955, %v1010
    %v1012 = vpop.f32.mrb[0].mxu0
    %1013 = vmatprep.mubr.bf16.mxu0 0
    %1014 = vmatmul.mubr.bf16.gmra.mrb[0].mxu0 %v350
    %v1015 = vpop.f32.mrb[0].mxu0
    %v1016 = vadd.f32 %v955, %v1015
    %v1017 = vpop.f32.mrb[0].mxu0
    %v1018 = vpop.f32.mrb[0].mxu0
    %v1019 = vadd.f32 %v955, %v1018
    %v1020 = vpop.f32.mrb[0].mxu0
    %1021 = vmatprep.mubr.bf16.mxu0 0
    %1022 = vmatmul.mubr.bf16.gmra.mrb[0].mxu0 %v351
    %v1023 = vpop.f32.mrb[0].mxu0
    %v1024 = vadd.f32 %v955, %v1023
    %v1025 = vpop.f32.mrb[0].mxu0
    %v1026 = vpop.f32.mrb[0].mxu0
    %v1027 = vadd.f32 %v955, %v1026
    %v1028 = vpop.f32.mrb[0].mxu0
    %1029 = vmatprep.mubr.bf16.mxu0 0
    %1030 = vmatmul.mubr.bf16.gmra.mrb[0].mxu0 %v352
    %v1031 = vpop.f32.mrb[0].mxu0
    %v1032 = vadd.f32 %v955, %v1031
    %v1033 = vpop.f32.mrb[0].mxu0
    %v1034 = vpop.f32.mrb[0].mxu0
    %v1035 = vadd.f32 %v955, %v1034
    %v1036 = vpop.f32.mrb[0].mxu0
    %1037 = vmatprep.mubr.bf16.mxu0 0
    %1038 = vmatmul.mubr.bf16.gmra.mrb[0].mxu0 %v353
    %v1039 = vpop.f32.mrb[0].mxu0
    %v1040 = vadd.f32 %v955, %v1039
    %v1041 = vpop.f32.mrb[0].mxu0
    %v1042 = vpop.f32.mrb[0].mxu0
    %v1043 = vadd.f32 %v955, %v1042
    %v1044 = vpop.f32.mrb[0].mxu0
    %1045 = vmatprep.mubr.bf16.mxu0 0
    %1046 = vmatmul.mubr.bf16.gmra.mrb[0].mxu0 %v354
    %v1047 = vpop.f32.mrb[0].mxu0
    %v1048 = vadd.f32 %v955, %v1047
    %v1049 = vpop.f32.mrb[0].mxu0
    %v1050 = vpop.f32.mrb[0].mxu0
    %v1051 = vadd.f32 %v955, %v1050
    %v1052 = vpop.f32.mrb[0].mxu0
    %1053 = vdwg.mxu0
    %1054 = vst [vmem:[#allocation11] sm:$0xff] %v992
    %1055 = vst [vmem:[#allocation11 + $0x8] sm:$0xff] %v995
    %1056 = vst [vmem:[#allocation11 + $0x10] sm:$0xff] %v1000
    %1057 = vst [vmem:[#allocation11 + $0x18] sm:$0xff] %v1003
    %1058 = vst [vmem:[#allocation11 + $0x20] sm:$0xff] %v1008
    %1059 = vst [vmem:[#allocation11 + $0x28] sm:$0xff] %v1011
    %1060 = vst [vmem:[#allocation11 + $0x30] sm:$0xff] %v1016
    %1061 = vst [vmem:[#allocation11 + $0x38] sm:$0xff] %v1019
    %1062 = vst [vmem:[#allocation11 + $0x40] sm:$0xff] %v1024
    %1063 = vst [vmem:[#allocation11 + $0x48] sm:$0xff] %v1027
    %1064 = vst [vmem:[#allocation11 + $0x50] sm:$0xff] %v1032
    %1065 = vst [vmem:[#allocation11 + $0x58] sm:$0xff] %v1035
    %1066 = vst [vmem:[#allocation11 + $0x60] sm:$0xff] %v1040
    %1067 = vst [vmem:[#allocation11 + $0x68] sm:$0xff] %v1043
    %1068 = vst [vmem:[#allocation11 + $0x70] sm:$0xff] %v1048
    %1069 = vst [vmem:[#allocation11 + $0x78] sm:$0xff] %v1051
    // Predicated region
    $region54: #{tpu_custom_call.1} parent=1 // pred_check
      _
    $region55: #{tpu_custom_call.1} parent=1 // pred_check_branch
      %1071 = sbr.rel (0) target = $region57
    $region56: #{tpu_custom_call.1} parent=1 // pred_region
      %s1073 = ssub.s32 2048, 2048
      %1074 = vsyncadd [#allocation4], %s1073
      %s1075 = sshll.u32 [#allocation11], 4
      %s1076 = int_to_ptr.vmem [resolvable:$true] %s1075
      %1081 = dma.vmem_to_hbm [thread:$0]  %s1076, 2048, %s8, [#allocation4], 128, 128, 8
    $region57: #{tpu_custom_call.1} parent=1 // pred_fallthru
      _
    // Predicated region
    $region58: #{tpu_custom_call.1} parent=1 // pred_check
      _
    $region59: #{tpu_custom_call.1} parent=1 // pred_check_branch
      %1083 = sbr.rel (0) target = $region61
    $region60: #{tpu_custom_call.1} parent=1 // pred_region
      %1084 = dma.done [#allocation4], 2048
    $region61: #{tpu_custom_call.1} parent=1 // pred_fallthru
      _
    %1085 = vsyncpa [#allocation3], 1
    %1086 = vsyncpa [#allocation6], 1
    %1087 = vsyncpa [#allocation9], 1
    %1088 = vsyncpa [#allocation4], 1

</llo_original>
